<compile_context>
chip_gen: v6e
topology: v6e:2x2x1
jax: 0.10.0
libtpu: 0.0.40
codegen_flags: <defaults>
</compile_context>

<pallas_src>
import functools

import jax
import jax.numpy as jnp
from jax import lax
from jax.experimental import pallas as pl
from jax.experimental.pallas import tpu as pltpu

SUBLANES = 128   # lanes per inner sub-slice (vreg lane width)
ROW_CHUNK = 8    # output rows per accumulator chunk (one sublane group)


def _corr2d_kernel(w_ref, b_ref, x_ref, o_ref, *, kh, kw):
    """One grid step: (H, W, LB) image slab -> (OH, OW, LB) outputs.

    w_ref: (kh*kw,) f32 SMEM scalar taps
    b_ref: (1,)     f32 SMEM
    x_ref: (H, W, LB)   VMEM (f32 or bf16), batch on lanes
    o_ref: (OH, OW, LB) f32 VMEM, lane-dense unmasked stores
    """
    oh, ow, lb = o_ref.shape
    n_sub = lb // SUBLANES
    bias = b_ref[0]

    def lane_body(k, carry):
        off = pl.multiple_of(k * SUBLANES, SUBLANES)
        # Row chunks of <=8 bound the live set (acc + one tap slice ~32 vregs).
        for r0 in range(0, oh, ROW_CHUNK):
            rows = min(ROW_CHUNK, oh - r0)
            acc = jnp.full((rows, ow, SUBLANES), bias, jnp.float32)
            # Static unroll over the small kernel window; taps are ref-sliced
            # loads (i on leading axis, j on sublanes), never a copied slab.
            for i in range(kh):
                for j in range(kw):
                    tap = x_ref[r0 + i:r0 + i + rows,
                                j:j + ow,
                                pl.ds(off, SUBLANES)]
                    acc = acc + w_ref[i * kw + j] * tap.astype(jnp.float32)
            o_ref[r0:r0 + rows, :, pl.ds(off, SUBLANES)] = acc
        return carry

    lax.fori_loop(0, n_sub, lane_body, None)


def _pick_lane_block(bp):
    # Prefer large lane blocks (amortize ~0.35 us/step), but keep >=2 grid
    # steps when the batch allows it (v7x has 2 TensorCores per chip).
    for blk in (1024, 512, 256, 128):
        if bp >= 2 * blk:
            return blk
    return 128


def corr2d_lane_major(x_l, weight, bias, *, lane_block=None,
                      x_dtype=jnp.float32):
    """corr2d + bias on a lane-major slab.

    x_l: (H, W, B)  -> returns (OH, OW, B) float32.  No HBM transposes.
    x_dtype=jnp.bfloat16 halves input HBM bytes (v6e/v7x); accumulation is f32.
    """
    H, W, B = x_l.shape
    kh, kw = weight.shape
    oh, ow = H - kh + 1, W - kw + 1

    bp = ((B + SUBLANES - 1) // SUBLANES) * SUBLANES
    if lane_block is None:
        lane_block = _pick_lane_block(bp)
    bp = ((bp + lane_block - 1) // lane_block) * lane_block

    x_l = x_l.astype(x_dtype)
    if bp != B:
        x_l = jnp.pad(x_l, ((0, 0), (0, 0), (0, bp - B)))

    w_flat = weight.astype(jnp.float32).reshape(-1)   # (kh*kw,) tiny SMEM buffer
    b_vec = jnp.asarray(bias, jnp.float32).reshape(1)

    out_l = pl.pallas_call(
        functools.partial(_corr2d_kernel, kh=kh, kw=kw),
        out_shape=jax.ShapeDtypeStruct((oh, ow, bp), jnp.float32),
        grid=(bp // lane_block,),
        in_specs=[
            pl.BlockSpec(memory_space=pltpu.MemorySpace.SMEM),       # weight taps
            pl.BlockSpec(memory_space=pltpu.MemorySpace.SMEM),       # bias
            pl.BlockSpec((H, W, lane_block), lambda g: (0, 0, g)),   # image slab
        ],
        out_specs=pl.BlockSpec((oh, ow, lane_block), lambda g: (0, 0, g)),
        compiler_params=pltpu.CompilerParams(
            dimension_semantics=("parallel",),   # shard lane blocks across TCs
        ),
    )(w_flat, b_vec, x_l)

    return out_l[:, :, :B] if bp != B else out_l


def corr2d_batch(xs, weight, bias, **kwargs):
    """(B, H, W) convenience wrapper.  Prefer corr2d_lane_major upstream to
    avoid the extra HBM transpose passes (they add full read+write passes)."""
    x_l = jnp.transpose(xs.astype(jnp.float32), (1, 2, 0))
    out_l = corr2d_lane_major(x_l, weight, bias, **kwargs)
    return jnp.transpose(out_l, (2, 0, 1))


def conv2d_forward(x, weight, bias):
    """Module-faithful Conv2D.forward: corr2d(x, weight) + bias for (H, W) x."""
    return corr2d_batch(x[None], weight, bias)[0]


if __name__ == "__main__":
    key = jax.random.PRNGKey(0)
    k_x, k_w, k_b = jax.random.split(key, 3)

    H, W = 16, 16
    kh, kw = 3, 3
    oh, ow = H - kh + 1, W - kw + 1

    # torch.rand(kernel_size) -> uniform [0, 1); torch.zeros(1) -> zero bias.
    weight = jax.random.uniform(k_w, (kh, kw), dtype=jnp.float32)
    bias = jnp.zeros((1,), dtype=jnp.float32)

    # --- module-faithful single-image forward --------------------------------
    x = jax.random.normal(k_x, (H, W), dtype=jnp.float32)
    y = conv2d_forward(x, weight, bias)
    jax.block_until_ready(y)

    ref = jnp.zeros((oh, ow), jnp.float32)
    for i in range(kh):
        for j in range(kw):
            ref = ref + weight[i, j] * x[i:i + oh, j:j + ow]
    ref = ref + bias[0]
    assert y.shape == (oh, ow) and y.dtype == jnp.float32
    assert jnp.allclose(y, ref, atol=1e-5), "single-image mismatch vs reference"

    # --- lane-major batched path: 1024 images, 512-lane blocks, 2 grid steps --
    B = 1024
    xs_l = jax.random.normal(k_b, (H, W, B), dtype=jnp.float32)  # lane-major
    ys_l = corr2d_lane_major(xs_l, weight, bias)
    jax.block_until_ready(ys_l)

    ref_l = jnp.zeros((oh, ow, B), jnp.float32)
    for i in range(kh):
        for j in range(kw):
            ref_l = ref_l + weight[i, j] * xs_l[i:i + oh, j:j + ow, :]
    ref_l = ref_l + bias[0]
    assert ys_l.shape == (oh, ow, B) and ys_l.dtype == jnp.float32
    assert jnp.allclose(ys_l, ref_l, atol=1e-5), "batched mismatch vs reference"

    # --- bf16 image slab (v6e/v7x lever), f32 accumulation --------------------
    ys_bf = corr2d_lane_major(xs_l, weight, bias, x_dtype=jnp.bfloat16)
    jax.block_until_ready(ys_bf)
    xs_q = xs_l.astype(jnp.bfloat16).astype(jnp.float32)   # same input quantization
    ref_q = jnp.zeros((oh, ow, B), jnp.float32)
    for i in range(kh):
        for j in range(kw):
            ref_q = ref_q + weight[i, j] * xs_q[i:i + oh, j:j + ow, :]
    ref_q = ref_q + bias[0]
    assert ys_bf.shape == (oh, ow, B) and ys_bf.dtype == jnp.float32
    assert jnp.allclose(ys_bf, ref_q, atol=1e-4), "bf16-slab mismatch vs reference"

    print("KERNEL_OK")
</pallas_src>

<mosaic_0001>
module attributes {stable_mosaic.version = 11 : i64} {
  func.func @_corr2d_kernel(%arg0: i32, %arg1: memref<9xf32, #tpu.memory_space<smem>>, %arg2: memref<1xf32, #tpu.memory_space<smem>>, %arg3: memref<16x16x128xf32, #tpu.memory_space<vmem>>, %arg4: memref<14x14x128xf32, #tpu.memory_space<vmem>>) attributes {dimension_semantics = [#tpu.dimension_semantics<parallel>], iteration_bounds = array<i64: 1>, scalar_prefetch = 0 : i64, scratch_operands = 0 : i64, tpu.core_type = #tpu.core_type<tc>, window_params = [{transform_indices = @transform_0, window_bounds = array<i64: 9>}, {transform_indices = @transform_1, window_bounds = array<i64: 1>}, {transform_indices = @transform_2, window_bounds = array<i64: 16, 16, 128>}, {transform_indices = @transform_3, window_bounds = array<i64: 14, 14, 128>}]} {
    %c0 = arith.constant 0 : index
    %0 = memref.load %arg2[%c0] : memref<1xf32, #tpu.memory_space<smem>>
    %c0_i32 = arith.constant 0 : i32
    %c128_i32 = arith.constant 128 : i32
    %1 = arith.muli %c0_i32, %c128_i32 : i32
    %2 = tpu.assume_multiple %1, 128 : i32
    %3 = vector.broadcast %0 : f32 to vector<8x14x128xf32>
    %c0_0 = arith.constant 0 : index
    %c0_1 = arith.constant 0 : index
    %4 = arith.index_cast %2 : i32 to index
    %5 = vector.load %arg3[%c0_0, %c0_1, %4] : memref<16x16x128xf32, #tpu.memory_space<vmem>>, vector<8x14x128xf32>
    %c0_2 = arith.constant 0 : index
    %6 = memref.load %arg1[%c0_2] : memref<9xf32, #tpu.memory_space<smem>>
    %7 = vector.broadcast %6 : f32 to vector<8x14x128xf32>
    %8 = arith.mulf %7, %5 : vector<8x14x128xf32>
    %9 = arith.addf %3, %8 : vector<8x14x128xf32>
    %c0_3 = arith.constant 0 : index
    %c1 = arith.constant 1 : index
    %10 = arith.index_cast %2 : i32 to index
    %11 = vector.load %arg3[%c0_3, %c1, %10] : memref<16x16x128xf32, #tpu.memory_space<vmem>>, vector<8x14x128xf32>
    %c1_4 = arith.constant 1 : index
    %12 = memref.load %arg1[%c1_4] : memref<9xf32, #tpu.memory_space<smem>>
    %13 = vector.broadcast %12 : f32 to vector<8x14x128xf32>
    %14 = arith.mulf %13, %11 : vector<8x14x128xf32>
    %15 = arith.addf %9, %14 : vector<8x14x128xf32>
    %c0_5 = arith.constant 0 : index
    %c2 = arith.constant 2 : index
    %16 = arith.index_cast %2 : i32 to index
    %17 = vector.load %arg3[%c0_5, %c2, %16] : memref<16x16x128xf32, #tpu.memory_space<vmem>>, vector<8x14x128xf32>
    %c2_6 = arith.constant 2 : index
    %18 = memref.load %arg1[%c2_6] : memref<9xf32, #tpu.memory_space<smem>>
    %19 = vector.broadcast %18 : f32 to vector<8x14x128xf32>
    %20 = arith.mulf %19, %17 : vector<8x14x128xf32>
    %21 = arith.addf %15, %20 : vector<8x14x128xf32>
    %c1_7 = arith.constant 1 : index
    %c0_8 = arith.constant 0 : index
    %22 = arith.index_cast %2 : i32 to index
    %23 = vector.load %arg3[%c1_7, %c0_8, %22] : memref<16x16x128xf32, #tpu.memory_space<vmem>>, vector<8x14x128xf32>
    %c3 = arith.constant 3 : index
    %24 = memref.load %arg1[%c3] : memref<9xf32, #tpu.memory_space<smem>>
    %25 = vector.broadcast %24 : f32 to vector<8x14x128xf32>
    %26 = arith.mulf %25, %23 : vector<8x14x128xf32>
    %27 = arith.addf %21, %26 : vector<8x14x128xf32>
    %c1_9 = arith.constant 1 : index
    %c1_10 = arith.constant 1 : index
    %28 = arith.index_cast %2 : i32 to index
    %29 = vector.load %arg3[%c1_9, %c1_10, %28] : memref<16x16x128xf32, #tpu.memory_space<vmem>>, vector<8x14x128xf32>
    %c4 = arith.constant 4 : index
    %30 = memref.load %arg1[%c4] : memref<9xf32, #tpu.memory_space<smem>>
    %31 = vector.broadcast %30 : f32 to vector<8x14x128xf32>
    %32 = arith.mulf %31, %29 : vector<8x14x128xf32>
    %33 = arith.addf %27, %32 : vector<8x14x128xf32>
    %c1_11 = arith.constant 1 : index
    %c2_12 = arith.constant 2 : index
    %34 = arith.index_cast %2 : i32 to index
    %35 = vector.load %arg3[%c1_11, %c2_12, %34] : memref<16x16x128xf32, #tpu.memory_space<vmem>>, vector<8x14x128xf32>
    %c5 = arith.constant 5 : index
    %36 = memref.load %arg1[%c5] : memref<9xf32, #tpu.memory_space<smem>>
    %37 = vector.broadcast %36 : f32 to vector<8x14x128xf32>
    %38 = arith.mulf %37, %35 : vector<8x14x128xf32>
    %39 = arith.addf %33, %38 : vector<8x14x128xf32>
    %c2_13 = arith.constant 2 : index
    %c0_14 = arith.constant 0 : index
    %40 = arith.index_cast %2 : i32 to index
    %41 = vector.load %arg3[%c2_13, %c0_14, %40] : memref<16x16x128xf32, #tpu.memory_space<vmem>>, vector<8x14x128xf32>
    %c6 = arith.constant 6 : index
    %42 = memref.load %arg1[%c6] : memref<9xf32, #tpu.memory_space<smem>>
    %43 = vector.broadcast %42 : f32 to vector<8x14x128xf32>
    %44 = arith.mulf %43, %41 : vector<8x14x128xf32>
    %45 = arith.addf %39, %44 : vector<8x14x128xf32>
    %c2_15 = arith.constant 2 : index
    %c1_16 = arith.constant 1 : index
    %46 = arith.index_cast %2 : i32 to index
    %47 = vector.load %arg3[%c2_15, %c1_16, %46] : memref<16x16x128xf32, #tpu.memory_space<vmem>>, vector<8x14x128xf32>
    %c7 = arith.constant 7 : index
    %48 = memref.load %arg1[%c7] : memref<9xf32, #tpu.memory_space<smem>>
    %49 = vector.broadcast %48 : f32 to vector<8x14x128xf32>
    %50 = arith.mulf %49, %47 : vector<8x14x128xf32>
    %51 = arith.addf %45, %50 : vector<8x14x128xf32>
    %c2_17 = arith.constant 2 : index
    %c2_18 = arith.constant 2 : index
    %52 = arith.index_cast %2 : i32 to index
    %53 = vector.load %arg3[%c2_17, %c2_18, %52] : memref<16x16x128xf32, #tpu.memory_space<vmem>>, vector<8x14x128xf32>
    %c8 = arith.constant 8 : index
    %54 = memref.load %arg1[%c8] : memref<9xf32, #tpu.memory_space<smem>>
    %55 = vector.broadcast %54 : f32 to vector<8x14x128xf32>
    %56 = arith.mulf %55, %53 : vector<8x14x128xf32>
    %57 = arith.addf %51, %56 : vector<8x14x128xf32>
    %c0_19 = arith.constant 0 : index
    %c0_20 = arith.constant 0 : index
    %58 = arith.index_cast %2 : i32 to index
    %59 = vector.load %arg4[%c0_19, %c0_20, %58] : memref<14x14x128xf32, #tpu.memory_space<vmem>>, vector<8x14x128xf32>
    tpu.vector_store %arg4[%c0_19, %c0_20, %58], %57 {strides = array<i32>} : memref<14x14x128xf32, #tpu.memory_space<vmem>>, vector<8x14x128xf32>,
    %60 = vector.broadcast %0 : f32 to vector<6x14x128xf32>
    %c8_21 = arith.constant 8 : index
    %c0_22 = arith.constant 0 : index
    %61 = arith.index_cast %2 : i32 to index
    %62 = vector.load %arg3[%c8_21, %c0_22, %61] : memref<16x16x128xf32, #tpu.memory_space<vmem>>, vector<6x14x128xf32>
    %c0_23 = arith.constant 0 : index
    %63 = memref.load %arg1[%c0_23] : memref<9xf32, #tpu.memory_space<smem>>
    %64 = vector.broadcast %63 : f32 to vector<6x14x128xf32>
    %65 = arith.mulf %64, %62 : vector<6x14x128xf32>
    %66 = arith.addf %60, %65 : vector<6x14x128xf32>
    %c8_24 = arith.constant 8 : index
    %c1_25 = arith.constant 1 : index
    %67 = arith.index_cast %2 : i32 to index
    %68 = vector.load %arg3[%c8_24, %c1_25, %67] : memref<16x16x128xf32, #tpu.memory_space<vmem>>, vector<6x14x128xf32>
    %c1_26 = arith.constant 1 : index
    %69 = memref.load %arg1[%c1_26] : memref<9xf32, #tpu.memory_space<smem>>
    %70 = vector.broadcast %69 : f32 to vector<6x14x128xf32>
    %71 = arith.mulf %70, %68 : vector<6x14x128xf32>
    %72 = arith.addf %66, %71 : vector<6x14x128xf32>
    %c8_27 = arith.constant 8 : index
    %c2_28 = arith.constant 2 : index
    %73 = arith.index_cast %2 : i32 to index
    %74 = vector.load %arg3[%c8_27, %c2_28, %73] : memref<16x16x128xf32, #tpu.memory_space<vmem>>, vector<6x14x128xf32>
    %c2_29 = arith.constant 2 : index
    %75 = memref.load %arg1[%c2_29] : memref<9xf32, #tpu.memory_space<smem>>
    %76 = vector.broadcast %75 : f32 to vector<6x14x128xf32>
    %77 = arith.mulf %76, %74 : vector<6x14x128xf32>
    %78 = arith.addf %72, %77 : vector<6x14x128xf32>
    %c9 = arith.constant 9 : index
    %c0_30 = arith.constant 0 : index
    %79 = arith.index_cast %2 : i32 to index
    %80 = vector.load %arg3[%c9, %c0_30, %79] : memref<16x16x128xf32, #tpu.memory_space<vmem>>, vector<6x14x128xf32>
    %c3_31 = arith.constant 3 : index
    %81 = memref.load %arg1[%c3_31] : memref<9xf32, #tpu.memory_space<smem>>
    %82 = vector.broadcast %81 : f32 to vector<6x14x128xf32>
    %83 = arith.mulf %82, %80 : vector<6x14x128xf32>
    %84 = arith.addf %78, %83 : vector<6x14x128xf32>
    %c9_32 = arith.constant 9 : index
    %c1_33 = arith.constant 1 : index
    %85 = arith.index_cast %2 : i32 to index
    %86 = vector.load %arg3[%c9_32, %c1_33, %85] : memref<16x16x128xf32, #tpu.memory_space<vmem>>, vector<6x14x128xf32>
    %c4_34 = arith.constant 4 : index
    %87 = memref.load %arg1[%c4_34] : memref<9xf32, #tpu.memory_space<smem>>
    %88 = vector.broadcast %87 : f32 to vector<6x14x128xf32>
    %89 = arith.mulf %88, %86 : vector<6x14x128xf32>
    %90 = arith.addf %84, %89 : vector<6x14x128xf32>
    %c9_35 = arith.constant 9 : index
    %c2_36 = arith.constant 2 : index
    %91 = arith.index_cast %2 : i32 to index
    %92 = vector.load %arg3[%c9_35, %c2_36, %91] : memref<16x16x128xf32, #tpu.memory_space<vmem>>, vector<6x14x128xf32>
    %c5_37 = arith.constant 5 : index
    %93 = memref.load %arg1[%c5_37] : memref<9xf32, #tpu.memory_space<smem>>
    %94 = vector.broadcast %93 : f32 to vector<6x14x128xf32>
    %95 = arith.mulf %94, %92 : vector<6x14x128xf32>
    %96 = arith.addf %90, %95 : vector<6x14x128xf32>
    %c10 = arith.constant 10 : index
    %c0_38 = arith.constant 0 : index
    %97 = arith.index_cast %2 : i32 to index
    %98 = vector.load %arg3[%c10, %c0_38, %97] : memref<16x16x128xf32, #tpu.memory_space<vmem>>, vector<6x14x128xf32>
    %c6_39 = arith.constant 6 : index
    %99 = memref.load %arg1[%c6_39] : memref<9xf32, #tpu.memory_space<smem>>
    %100 = vector.broadcast %99 : f32 to vector<6x14x128xf32>
    %101 = arith.mulf %100, %98 : vector<6x14x128xf32>
    %102 = arith.addf %96, %101 : vector<6x14x128xf32>
    %c10_40 = arith.constant 10 : index
    %c1_41 = arith.constant 1 : index
    %103 = arith.index_cast %2 : i32 to index
    %104 = vector.load %arg3[%c10_40, %c1_41, %103] : memref<16x16x128xf32, #tpu.memory_space<vmem>>, vector<6x14x128xf32>
    %c7_42 = arith.constant 7 : index
    %105 = memref.load %arg1[%c7_42] : memref<9xf32, #tpu.memory_space<smem>>
    %106 = vector.broadcast %105 : f32 to vector<6x14x128xf32>
    %107 = arith.mulf %106, %104 : vector<6x14x128xf32>
    %108 = arith.addf %102, %107 : vector<6x14x128xf32>
    %c10_43 = arith.constant 10 : index
    %c2_44 = arith.constant 2 : index
    %109 = arith.index_cast %2 : i32 to index
    %110 = vector.load %arg3[%c10_43, %c2_44, %109] : memref<16x16x128xf32, #tpu.memory_space<vmem>>, vector<6x14x128xf32>
    %c8_45 = arith.constant 8 : index
    %111 = memref.load %arg1[%c8_45] : memref<9xf32, #tpu.memory_space<smem>>
    %112 = vector.broadcast %111 : f32 to vector<6x14x128xf32>
    %113 = arith.mulf %112, %110 : vector<6x14x128xf32>
    %114 = arith.addf %108, %113 : vector<6x14x128xf32>
    %c8_46 = arith.constant 8 : index
    %c0_47 = arith.constant 0 : index
    %115 = arith.index_cast %2 : i32 to index
    %116 = vector.load %arg4[%c8_46, %c0_47, %115] : memref<14x14x128xf32, #tpu.memory_space<vmem>>, vector<6x14x128xf32>
    tpu.vector_store %arg4[%c8_46, %c0_47, %115], %114 {strides = array<i32>} : memref<14x14x128xf32, #tpu.memory_space<vmem>>, vector<6x14x128xf32>,
    %c1_i32 = arith.constant 1 : i32
    return
  }
  func.func @transform_0(%arg0: i32) -> i32 {
    %c0_i32 = arith.constant 0 : i32
    %c0_i32_0 = arith.constant 0 : i32
    return %c0_i32 : i32
  }
  func.func @transform_1(%arg0: i32) -> i32 {
    %c0_i32 = arith.constant 0 : i32
    %c0_i32_0 = arith.constant 0 : i32
    return %c0_i32 : i32
  }
  func.func @transform_2(%arg0: i32) -> (i32, i32, i32) {
    %c0_i32 = arith.constant 0 : i32
    %c0_i32_0 = arith.constant 0 : i32
    %c0_i32_1 = arith.constant 0 : i32
    return %c0_i32, %c0_i32_0, %arg0 : i32, i32, i32
  }
  func.func @transform_3(%arg0: i32) -> (i32, i32, i32) {
    %c0_i32 = arith.constant 0 : i32
    %c0_i32_0 = arith.constant 0 : i32
    %c0_i32_1 = arith.constant 0 : i32
    return %c0_i32, %c0_i32_0, %arg0 : i32, i32, i32
  }
}

</mosaic_0001>

<llo_original>
// kernel: tpu_custom_call.1
$region0: #{tpu_custom_call.1}
  #allocation0 [shape = 'u32[]', space=smem, size = 0x4, offset = 0x4, fixed_abs, tag = 'smem constant byte address 0x4 - core index']
  #allocation1 [shape = 'u32[144,128]{1,0:T(1,128)}', space=vmem, size = 0x12000, scoped, tag = 'internal scratch']
  #allocation2 [shape = 'f32[1]{0:T(128)S(6)}', space=smem, size = 0x200, scoped, tag = 'scoped memory for tpu_custom_call.1']
  %s0 = inlined_call_operand.vmem [shape: f32[9], index: 0, kind: input, shape index: {}]
  %s1 = inlined_call_operand.<no memory space> [shape: f32[1], index: 1, kind: input, shape index: {}]
  %s2 = inlined_call_operand.hbm [shape: f32[16,16,128], index: 2, kind: input, shape index: {}]
  %s3 = inlined_call_operand.hbm [shape: f32[14,14,128], index: 3, kind: output, shape index: {}]
  %s4 = sld [smem:[#allocation0]]
  $region30: #{tpu_custom_call.1} parent=0
    _
  %s6 = ssub.s32 1, %s4
  %s7 = scalar_select 0, %s6, %s4
  %8 = sst [smem:[#allocation2]] %s1
  $region1: #{tpu_custom_call.1} parent=0
    #allocation3 [shape = 'u8[512]{0}', space=smem, size = 0x200, scoped, tag = 'input window, operand 0, single buffered']
    #allocation4 [shape = 's32[1]{0}', space=sflag, size = 0x4, scoped, tag = 'scoped memory for tpu_custom_call.1']
    #allocation5 [shape = 's32[1]{0}', space=sflag, size = 0x4, scoped, tag = 'scoped memory for tpu_custom_call.1']
    #allocation6 [shape = 's32[1]{0}', space=sflag, size = 0x4, scoped, tag = 'scoped memory for tpu_custom_call.1']
    #allocation7 [shape = 'u8[131072]{0}', space=vmem, size = 0x20000, scoped, tag = 'input window, operand 2, single buffered']
    #allocation8 [shape = 'u8[114688]{0}', space=vmem, size = 0x1c000, scoped, tag = 'output window, operand 0, single buffered']
    %9 = vsyncpa [#allocation6], 0
    %10 = vsyncpa [#allocation4], 0
    %11 = vsyncpa [#allocation5], 0
    // Predicated region
    $region2: #{tpu_custom_call.1} parent=1 // pred_check
      _
    $region3: #{tpu_custom_call.1} parent=1 // pred_check_branch
      %13 = sbr.rel (0) target = $region5
    $region4: #{tpu_custom_call.1} parent=1 // pred_region
      %s15 = ssub.s32 16, 16
      %16 = vsyncadd [#allocation6], %s15
      %s18 = sshll.u32 %s0, 4
      %s19 = int_to_ptr.vmem [resolvable:$true] %s18
      %21 = dma.vmem_to_smem %s19, 16, [#allocation3], [#allocation6]
    $region5: #{tpu_custom_call.1} parent=1 // pred_fallthru
      _
    // Predicated region
    $region6: #{tpu_custom_call.1} parent=1 // pred_check
      _
    $region7: #{tpu_custom_call.1} parent=1 // pred_check_branch
      %23 = sbr.rel (0) target = $region9
    $region8: #{tpu_custom_call.1} parent=1 // pred_region
      _
    $region9: #{tpu_custom_call.1} parent=1 // pred_fallthru
      _
    // Predicated region
    $region10: #{tpu_custom_call.1} parent=1 // pred_check
      _
    $region11: #{tpu_custom_call.1} parent=1 // pred_check_branch
      %25 = sbr.rel (0) target = $region13
    $region12: #{tpu_custom_call.1} parent=1 // pred_region
      %s27 = ssub.s32 4096, 4096
      %28 = vsyncadd [#allocation4], %s27
      %s29 = sshll.u32 [#allocation7], 4
      %s30 = int_to_ptr.vmem [resolvable:$true] %s29
      %35 = dma.hbm_to_vmem [thread:$0]  %s2, 4096, %s30, [#allocation4], 128, 128, 8
    $region13: #{tpu_custom_call.1} parent=1 // pred_fallthru
      _
    // Predicated region
    $region14: #{tpu_custom_call.1} parent=1 // pred_check
      _
    $region15: #{tpu_custom_call.1} parent=1 // pred_check_branch
      %37 = sbr.rel (0) target = $region17
    $region16: #{tpu_custom_call.1} parent=1 // pred_region
      %38 = dma.done [#allocation6], 16
    $region17: #{tpu_custom_call.1} parent=1 // pred_fallthru
      _
    // Predicated region
    $region18: #{tpu_custom_call.1} parent=1 // pred_check
      _
    $region19: #{tpu_custom_call.1} parent=1 // pred_check_branch
      %40 = sbr.rel (0) target = $region21
    $region20: #{tpu_custom_call.1} parent=1 // pred_region
      %41 = dma.done [#allocation4], 4096
    $region21: #{tpu_custom_call.1} parent=1 // pred_fallthru
      _
    %42 = sfence
    %s43 = sld [smem:[#allocation2]]
    %v44 = vstv %s43
    %v45 = vld [vmem:[#allocation7] sm:$0xff]
    %v46 = vld [vmem:[#allocation7 + $0x8] sm:$0x3f]
    %v47 = vld [vmem:[#allocation7 + $0x10] sm:$0xff]
    %v48 = vld [vmem:[#allocation7 + $0x18] sm:$0x3f]
    %v49 = vld [vmem:[#allocation7 + $0x20] sm:$0xff]
    %v50 = vld [vmem:[#allocation7 + $0x28] sm:$0x3f]
    %v51 = vld [vmem:[#allocation7 + $0x30] sm:$0xff]
    %v52 = vld [vmem:[#allocation7 + $0x38] sm:$0x3f]
    %v53 = vld [vmem:[#allocation7 + $0x40] sm:$0xff]
    %v54 = vld [vmem:[#allocation7 + $0x48] sm:$0x3f]
    %v55 = vld [vmem:[#allocation7 + $0x50] sm:$0xff]
    %v56 = vld [vmem:[#allocation7 + $0x58] sm:$0x3f]
    %v57 = vld [vmem:[#allocation7 + $0x60] sm:$0xff]
    %v58 = vld [vmem:[#allocation7 + $0x68] sm:$0x3f]
    %v59 = vld [vmem:[#allocation7 + $0x70] sm:$0xff]
    %v60 = vld [vmem:[#allocation7 + $0x78] sm:$0x3f]
    %s61 = sld [smem:[#allocation3]]
    %v62 = vstv %s61
    %v63 = vmul.f32 %v62, %v45
    %v64 = vmul.f32 %v62, %v46
    %v65 = vmul.f32 %v62, %v47
    %v66 = vmul.f32 %v62, %v48
    %v67 = vmul.f32 %v62, %v49
    %v68 = vmul.f32 %v62, %v50
    %v69 = vmul.f32 %v62, %v51
    %v70 = vmul.f32 %v62, %v52
    %v71 = vmul.f32 %v62, %v53
    %v72 = vmul.f32 %v62, %v54
    %v73 = vmul.f32 %v62, %v55
    %v74 = vmul.f32 %v62, %v56
    %v75 = vmul.f32 %v62, %v57
    %v76 = vmul.f32 %v62, %v58
    %v77 = vmul.f32 %v62, %v59
    %v78 = vmul.f32 %v62, %v60
    %v79 = vadd.f32 %v44, %v63
    %v80 = vadd.f32 %v44, %v64
    %v81 = vadd.f32 %v44, %v65
    %v82 = vadd.f32 %v44, %v66
    %v83 = vadd.f32 %v44, %v67
    %v84 = vadd.f32 %v44, %v68
    %v85 = vadd.f32 %v44, %v69
    %v86 = vadd.f32 %v44, %v70
    %v87 = vadd.f32 %v44, %v71
    %v88 = vadd.f32 %v44, %v72
    %v89 = vadd.f32 %v44, %v73
    %v90 = vadd.f32 %v44, %v74
    %v91 = vadd.f32 %v44, %v75
    %v92 = vadd.f32 %v44, %v76
    %v93 = vadd.f32 %v44, %v77
    %v94 = vadd.f32 %v44, %v78
    %v95 = vld [vmem:[#allocation7 + $0x1] sm:$0xff]
    %v96 = vld [vmem:[#allocation7 + $0x9] sm:$0x3f]
    %v97 = vld [vmem:[#allocation7 + $0x11] sm:$0xff]
    %v98 = vld [vmem:[#allocation7 + $0x19] sm:$0x3f]
    %v99 = vld [vmem:[#allocation7 + $0x21] sm:$0xff]
    %v100 = vld [vmem:[#allocation7 + $0x29] sm:$0x3f]
    %v101 = vld [vmem:[#allocation7 + $0x31] sm:$0xff]
    %v102 = vld [vmem:[#allocation7 + $0x39] sm:$0x3f]
    %v103 = vld [vmem:[#allocation7 + $0x41] sm:$0xff]
    %v104 = vld [vmem:[#allocation7 + $0x49] sm:$0x3f]
    %v105 = vld [vmem:[#allocation7 + $0x51] sm:$0xff]
    %v106 = vld [vmem:[#allocation7 + $0x59] sm:$0x3f]
    %v107 = vld [vmem:[#allocation7 + $0x61] sm:$0xff]
    %v108 = vld [vmem:[#allocation7 + $0x69] sm:$0x3f]
    %v109 = vld [vmem:[#allocation7 + $0x71] sm:$0xff]
    %v110 = vld [vmem:[#allocation7 + $0x79] sm:$0x3f]
    %s111 = sld [smem:[#allocation3 + $0x1]]
    %v112 = vstv %s111
    %v113 = vmul.f32 %v112, %v95
    %v114 = vmul.f32 %v112, %v96
    %v115 = vmul.f32 %v112, %v97
    %v116 = vmul.f32 %v112, %v98
    %v117 = vmul.f32 %v112, %v99
    %v118 = vmul.f32 %v112, %v100
    %v119 = vmul.f32 %v112, %v101
    %v120 = vmul.f32 %v112, %v102
    %v121 = vmul.f32 %v112, %v103
    %v122 = vmul.f32 %v112, %v104
    %v123 = vmul.f32 %v112, %v105
    %v124 = vmul.f32 %v112, %v106
    %v125 = vmul.f32 %v112, %v107
    %v126 = vmul.f32 %v112, %v108
    %v127 = vmul.f32 %v112, %v109
    %v128 = vmul.f32 %v112, %v110
    %v129 = vadd.f32 %v79, %v113
    %v130 = vadd.f32 %v80, %v114
    %v131 = vadd.f32 %v81, %v115
    %v132 = vadd.f32 %v82, %v116
    %v133 = vadd.f32 %v83, %v117
    %v134 = vadd.f32 %v84, %v118
    %v135 = vadd.f32 %v85, %v119
    %v136 = vadd.f32 %v86, %v120
    %v137 = vadd.f32 %v87, %v121
    %v138 = vadd.f32 %v88, %v122
    %v139 = vadd.f32 %v89, %v123
    %v140 = vadd.f32 %v90, %v124
    %v141 = vadd.f32 %v91, %v125
    %v142 = vadd.f32 %v92, %v126
    %v143 = vadd.f32 %v93, %v127
    %v144 = vadd.f32 %v94, %v128
    %v145 = vld [vmem:[#allocation7 + $0x2] sm:$0xff]
    %v146 = vld [vmem:[#allocation7 + $0xa] sm:$0x3f]
    %v147 = vld [vmem:[#allocation7 + $0x12] sm:$0xff]
    %v148 = vld [vmem:[#allocation7 + $0x1a] sm:$0x3f]
    %v149 = vld [vmem:[#allocation7 + $0x22] sm:$0xff]
    %v150 = vld [vmem:[#allocation7 + $0x2a] sm:$0x3f]
    %v151 = vld [vmem:[#allocation7 + $0x32] sm:$0xff]
    %v152 = vld [vmem:[#allocation7 + $0x3a] sm:$0x3f]
    %v153 = vld [vmem:[#allocation7 + $0x42] sm:$0xff]
    %v154 = vld [vmem:[#allocation7 + $0x4a] sm:$0x3f]
    %v155 = vld [vmem:[#allocation7 + $0x52] sm:$0xff]
    %v156 = vld [vmem:[#allocation7 + $0x5a] sm:$0x3f]
    %v157 = vld [vmem:[#allocation7 + $0x62] sm:$0xff]
    %v158 = vld [vmem:[#allocation7 + $0x6a] sm:$0x3f]
    %v159 = vld [vmem:[#allocation7 + $0x72] sm:$0xff]
    %v160 = vld [vmem:[#allocation7 + $0x7a] sm:$0x3f]
    %s161 = sld [smem:[#allocation3 + $0x2]]
    %v162 = vstv %s161
    %v163 = vmul.f32 %v162, %v145
    %v164 = vmul.f32 %v162, %v146
    %v165 = vmul.f32 %v162, %v147
    %v166 = vmul.f32 %v162, %v148
    %v167 = vmul.f32 %v162, %v149
    %v168 = vmul.f32 %v162, %v150
    %v169 = vmul.f32 %v162, %v151
    %v170 = vmul.f32 %v162, %v152
    %v171 = vmul.f32 %v162, %v153
    %v172 = vmul.f32 %v162, %v154
    %v173 = vmul.f32 %v162, %v155
    %v174 = vmul.f32 %v162, %v156
    %v175 = vmul.f32 %v162, %v157
    %v176 = vmul.f32 %v162, %v158
    %v177 = vmul.f32 %v162, %v159
    %v178 = vmul.f32 %v162, %v160
    %v179 = vadd.f32 %v129, %v163
    %v180 = vadd.f32 %v130, %v164
    %v181 = vadd.f32 %v131, %v165
    %v182 = vadd.f32 %v132, %v166
    %v183 = vadd.f32 %v133, %v167
    %v184 = vadd.f32 %v134, %v168
    %v185 = vadd.f32 %v135, %v169
    %v186 = vadd.f32 %v136, %v170
    %v187 = vadd.f32 %v137, %v171
    %v188 = vadd.f32 %v138, %v172
    %v189 = vadd.f32 %v139, %v173
    %v190 = vadd.f32 %v140, %v174
    %v191 = vadd.f32 %v141, %v175
    %v192 = vadd.f32 %v142, %v176
    %v193 = vadd.f32 %v143, %v177
    %v194 = vadd.f32 %v144, %v178
    %s195 = sadd.s32 0, 16
    %s196 = scalar_lea.vmem [#allocation7], %s195
    %v197 = vld [vmem:[%s196] sm:$0xff]
    %v198 = vld [vmem:[%s196 + $0x8] sm:$0x3f]
    %v199 = vld [vmem:[%s196 + $0x10] sm:$0xff]
    %v200 = vld [vmem:[%s196 + $0x18] sm:$0x3f]
    %v201 = vld [vmem:[%s196 + $0x20] sm:$0xff]
    %v202 = vld [vmem:[%s196 + $0x28] sm:$0x3f]
    %v203 = vld [vmem:[%s196 + $0x30] sm:$0xff]
    %v204 = vld [vmem:[%s196 + $0x38] sm:$0x3f]
    %v205 = vld [vmem:[%s196 + $0x40] sm:$0xff]
    %v206 = vld [vmem:[%s196 + $0x48] sm:$0x3f]
    %v207 = vld [vmem:[%s196 + $0x50] sm:$0xff]
    %v208 = vld [vmem:[%s196 + $0x58] sm:$0x3f]
    %v209 = vld [vmem:[%s196 + $0x60] sm:$0xff]
    %v210 = vld [vmem:[%s196 + $0x68] sm:$0x3f]
    %v211 = vld [vmem:[%s196 + $0x70] sm:$0xff]
    %v212 = vld [vmem:[%s196 + $0x78] sm:$0x3f]
    %s213 = sld [smem:[#allocation3 + $0x3]]
    %v214 = vstv %s213
    %v215 = vmul.f32 %v214, %v197
    %v216 = vmul.f32 %v214, %v198
    %v217 = vmul.f32 %v214, %v199
    %v218 = vmul.f32 %v214, %v200
    %v219 = vmul.f32 %v214, %v201
    %v220 = vmul.f32 %v214, %v202
    %v221 = vmul.f32 %v214, %v203
    %v222 = vmul.f32 %v214, %v204
    %v223 = vmul.f32 %v214, %v205
    %v224 = vmul.f32 %v214, %v206
    %v225 = vmul.f32 %v214, %v207
    %v226 = vmul.f32 %v214, %v208
    %v227 = vmul.f32 %v214, %v209
    %v228 = vmul.f32 %v214, %v210
    %v229 = vmul.f32 %v214, %v211
    %v230 = vmul.f32 %v214, %v212
    %v231 = vadd.f32 %v179, %v215
    %v232 = vadd.f32 %v180, %v216
    %v233 = vadd.f32 %v181, %v217
    %v234 = vadd.f32 %v182, %v218
    %v235 = vadd.f32 %v183, %v219
    %v236 = vadd.f32 %v184, %v220
    %v237 = vadd.f32 %v185, %v221
    %v238 = vadd.f32 %v186, %v222
    %v239 = vadd.f32 %v187, %v223
    %v240 = vadd.f32 %v188, %v224
    %v241 = vadd.f32 %v189, %v225
    %v242 = vadd.f32 %v190, %v226
    %v243 = vadd.f32 %v191, %v227
    %v244 = vadd.f32 %v192, %v228
    %v245 = vadd.f32 %v193, %v229
    %v246 = vadd.f32 %v194, %v230
    %v247 = vld [vmem:[%s196 + $0x1] sm:$0xff]
    %v248 = vld [vmem:[%s196 + $0x9] sm:$0x3f]
    %v249 = vld [vmem:[%s196 + $0x11] sm:$0xff]
    %v250 = vld [vmem:[%s196 + $0x19] sm:$0x3f]
    %v251 = vld [vmem:[%s196 + $0x21] sm:$0xff]
    %v252 = vld [vmem:[%s196 + $0x29] sm:$0x3f]
    %v253 = vld [vmem:[%s196 + $0x31] sm:$0xff]
    %v254 = vld [vmem:[%s196 + $0x39] sm:$0x3f]
    %v255 = vld [vmem:[%s196 + $0x41] sm:$0xff]
    %v256 = vld [vmem:[%s196 + $0x49] sm:$0x3f]
    %v257 = vld [vmem:[%s196 + $0x51] sm:$0xff]
    %v258 = vld [vmem:[%s196 + $0x59] sm:$0x3f]
    %v259 = vld [vmem:[%s196 + $0x61] sm:$0xff]
    %v260 = vld [vmem:[%s196 + $0x69] sm:$0x3f]
    %v261 = vld [vmem:[%s196 + $0x71] sm:$0xff]
    %v262 = vld [vmem:[%s196 + $0x79] sm:$0x3f]
    %s263 = sld [smem:[#allocation3 + $0x4]]
    %v264 = vstv %s263
    %v265 = vmul.f32 %v264, %v247
    %v266 = vmul.f32 %v264, %v248
    %v267 = vmul.f32 %v264, %v249
    %v268 = vmul.f32 %v264, %v250
    %v269 = vmul.f32 %v264, %v251
    %v270 = vmul.f32 %v264, %v252
    %v271 = vmul.f32 %v264, %v253
    %v272 = vmul.f32 %v264, %v254
    %v273 = vmul.f32 %v264, %v255
    %v274 = vmul.f32 %v264, %v256
    %v275 = vmul.f32 %v264, %v257
    %v276 = vmul.f32 %v264, %v258
    %v277 = vmul.f32 %v264, %v259
    %v278 = vmul.f32 %v264, %v260
    %v279 = vmul.f32 %v264, %v261
    %v280 = vmul.f32 %v264, %v262
    %v281 = vadd.f32 %v231, %v265
    %v282 = vadd.f32 %v232, %v266
    %v283 = vadd.f32 %v233, %v267
    %v284 = vadd.f32 %v234, %v268
    %v285 = vadd.f32 %v235, %v269
    %v286 = vadd.f32 %v236, %v270
    %v287 = vadd.f32 %v237, %v271
    %v288 = vadd.f32 %v238, %v272
    %v289 = vadd.f32 %v239, %v273
    %v290 = vadd.f32 %v240, %v274
    %v291 = vadd.f32 %v241, %v275
    %v292 = vadd.f32 %v242, %v276
    %v293 = vadd.f32 %v243, %v277
    %v294 = vadd.f32 %v244, %v278
    %v295 = vadd.f32 %v245, %v279
    %v296 = vadd.f32 %v246, %v280
    %v297 = vld [vmem:[%s196 + $0x2] sm:$0xff]
    %v298 = vld [vmem:[%s196 + $0xa] sm:$0x3f]
    %v299 = vld [vmem:[%s196 + $0x12] sm:$0xff]
    %v300 = vld [vmem:[%s196 + $0x1a] sm:$0x3f]
    %v301 = vld [vmem:[%s196 + $0x22] sm:$0xff]
    %v302 = vld [vmem:[%s196 + $0x2a] sm:$0x3f]
    %v303 = vld [vmem:[%s196 + $0x32] sm:$0xff]
    %v304 = vld [vmem:[%s196 + $0x3a] sm:$0x3f]
    %v305 = vld [vmem:[%s196 + $0x42] sm:$0xff]
    %v306 = vld [vmem:[%s196 + $0x4a] sm:$0x3f]
    %v307 = vld [vmem:[%s196 + $0x52] sm:$0xff]
    %v308 = vld [vmem:[%s196 + $0x5a] sm:$0x3f]
    %v309 = vld [vmem:[%s196 + $0x62] sm:$0xff]
    %v310 = vld [vmem:[%s196 + $0x6a] sm:$0x3f]
    %v311 = vld [vmem:[%s196 + $0x72] sm:$0xff]
    %v312 = vld [vmem:[%s196 + $0x7a] sm:$0x3f]
    %s313 = sld [smem:[#allocation3 + $0x5]]
    %v314 = vstv %s313
    %v315 = vmul.f32 %v314, %v297
    %v316 = vmul.f32 %v314, %v298
    %v317 = vmul.f32 %v314, %v299
    %v318 = vmul.f32 %v314, %v300
    %v319 = vmul.f32 %v314, %v301
    %v320 = vmul.f32 %v314, %v302
    %v321 = vmul.f32 %v314, %v303
    %v322 = vmul.f32 %v314, %v304
    %v323 = vmul.f32 %v314, %v305
    %v324 = vmul.f32 %v314, %v306
    %v325 = vmul.f32 %v314, %v307
    %v326 = vmul.f32 %v314, %v308
    %v327 = vmul.f32 %v314, %v309
    %v328 = vmul.f32 %v314, %v310
    %v329 = vmul.f32 %v314, %v311
    %v330 = vmul.f32 %v314, %v312
    %v331 = vadd.f32 %v281, %v315
    %v332 = vadd.f32 %v282, %v316
    %v333 = vadd.f32 %v283, %v317
    %v334 = vadd.f32 %v284, %v318
    %v335 = vadd.f32 %v285, %v319
    %v336 = vadd.f32 %v286, %v320
    %v337 = vadd.f32 %v287, %v321
    %v338 = vadd.f32 %v288, %v322
    %v339 = vadd.f32 %v289, %v323
    %v340 = vadd.f32 %v290, %v324
    %v341 = vadd.f32 %v291, %v325
    %v342 = vadd.f32 %v292, %v326
    %v343 = vadd.f32 %v293, %v327
    %v344 = vadd.f32 %v294, %v328
    %v345 = vadd.f32 %v295, %v329
    %v346 = vadd.f32 %v296, %v330
    %s347 = sadd.s32 0, 32
    %s348 = scalar_lea.vmem [#allocation7], %s347
    %v349 = vld [vmem:[%s348] sm:$0xff]
    %v350 = vld [vmem:[%s348 + $0x8] sm:$0x3f]
    %v351 = vld [vmem:[%s348 + $0x10] sm:$0xff]
    %v352 = vld [vmem:[%s348 + $0x18] sm:$0x3f]
    %v353 = vld [vmem:[%s348 + $0x20] sm:$0xff]
    %v354 = vld [vmem:[%s348 + $0x28] sm:$0x3f]
    %v355 = vld [vmem:[%s348 + $0x30] sm:$0xff]
    %v356 = vld [vmem:[%s348 + $0x38] sm:$0x3f]
    %v357 = vld [vmem:[%s348 + $0x40] sm:$0xff]
    %v358 = vld [vmem:[%s348 + $0x48] sm:$0x3f]
    %v359 = vld [vmem:[%s348 + $0x50] sm:$0xff]
    %v360 = vld [vmem:[%s348 + $0x58] sm:$0x3f]
    %v361 = vld [vmem:[%s348 + $0x60] sm:$0xff]
    %v362 = vld [vmem:[%s348 + $0x68] sm:$0x3f]
    %v363 = vld [vmem:[%s348 + $0x70] sm:$0xff]
    %v364 = vld [vmem:[%s348 + $0x78] sm:$0x3f]
    %s365 = sld [smem:[#allocation3 + $0x6]]
    %v366 = vstv %s365
    %v367 = vmul.f32 %v366, %v349
    %v368 = vmul.f32 %v366, %v350
    %v369 = vmul.f32 %v366, %v351
    %v370 = vmul.f32 %v366, %v352
    %v371 = vmul.f32 %v366, %v353
    %v372 = vmul.f32 %v366, %v354
    %v373 = vmul.f32 %v366, %v355
    %v374 = vmul.f32 %v366, %v356
    %v375 = vmul.f32 %v366, %v357
    %v376 = vmul.f32 %v366, %v358
    %v377 = vmul.f32 %v366, %v359
    %v378 = vmul.f32 %v366, %v360
    %v379 = vmul.f32 %v366, %v361
    %v380 = vmul.f32 %v366, %v362
    %v381 = vmul.f32 %v366, %v363
    %v382 = vmul.f32 %v366, %v364
    %v383 = vadd.f32 %v331, %v367
    %v384 = vadd.f32 %v332, %v368
    %v385 = vadd.f32 %v333, %v369
    %v386 = vadd.f32 %v334, %v370
    %v387 = vadd.f32 %v335, %v371
    %v388 = vadd.f32 %v336, %v372
    %v389 = vadd.f32 %v337, %v373
    %v390 = vadd.f32 %v338, %v374
    %v391 = vadd.f32 %v339, %v375
    %v392 = vadd.f32 %v340, %v376
    %v393 = vadd.f32 %v341, %v377
    %v394 = vadd.f32 %v342, %v378
    %v395 = vadd.f32 %v343, %v379
    %v396 = vadd.f32 %v344, %v380
    %v397 = vadd.f32 %v345, %v381
    %v398 = vadd.f32 %v346, %v382
    %v399 = vld [vmem:[%s348 + $0x1] sm:$0xff]
    %v400 = vld [vmem:[%s348 + $0x9] sm:$0x3f]
    %v401 = vld [vmem:[%s348 + $0x11] sm:$0xff]
    %v402 = vld [vmem:[%s348 + $0x19] sm:$0x3f]
    %v403 = vld [vmem:[%s348 + $0x21] sm:$0xff]
    %v404 = vld [vmem:[%s348 + $0x29] sm:$0x3f]
    %v405 = vld [vmem:[%s348 + $0x31] sm:$0xff]
    %v406 = vld [vmem:[%s348 + $0x39] sm:$0x3f]
    %v407 = vld [vmem:[%s348 + $0x41] sm:$0xff]
    %v408 = vld [vmem:[%s348 + $0x49] sm:$0x3f]
    %v409 = vld [vmem:[%s348 + $0x51] sm:$0xff]
    %v410 = vld [vmem:[%s348 + $0x59] sm:$0x3f]
    %v411 = vld [vmem:[%s348 + $0x61] sm:$0xff]
    %v412 = vld [vmem:[%s348 + $0x69] sm:$0x3f]
    %v413 = vld [vmem:[%s348 + $0x71] sm:$0xff]
    %v414 = vld [vmem:[%s348 + $0x79] sm:$0x3f]
    %s415 = sld [smem:[#allocation3 + $0x7]]
    %v416 = vstv %s415
    %v417 = vmul.f32 %v416, %v399
    %v418 = vmul.f32 %v416, %v400
    %v419 = vmul.f32 %v416, %v401
    %v420 = vmul.f32 %v416, %v402
    %v421 = vmul.f32 %v416, %v403
    %v422 = vmul.f32 %v416, %v404
    %v423 = vmul.f32 %v416, %v405
    %v424 = vmul.f32 %v416, %v406
    %v425 = vmul.f32 %v416, %v407
    %v426 = vmul.f32 %v416, %v408
    %v427 = vmul.f32 %v416, %v409
    %v428 = vmul.f32 %v416, %v410
    %v429 = vmul.f32 %v416, %v411
    %v430 = vmul.f32 %v416, %v412
    %v431 = vmul.f32 %v416, %v413
    %v432 = vmul.f32 %v416, %v414
    %v433 = vadd.f32 %v383, %v417
    %v434 = vadd.f32 %v384, %v418
    %v435 = vadd.f32 %v385, %v419
    %v436 = vadd.f32 %v386, %v420
    %v437 = vadd.f32 %v387, %v421
    %v438 = vadd.f32 %v388, %v422
    %v439 = vadd.f32 %v389, %v423
    %v440 = vadd.f32 %v390, %v424
    %v441 = vadd.f32 %v391, %v425
    %v442 = vadd.f32 %v392, %v426
    %v443 = vadd.f32 %v393, %v427
    %v444 = vadd.f32 %v394, %v428
    %v445 = vadd.f32 %v395, %v429
    %v446 = vadd.f32 %v396, %v430
    %v447 = vadd.f32 %v397, %v431
    %v448 = vadd.f32 %v398, %v432
    %v449 = vld [vmem:[%s348 + $0x2] sm:$0xff]
    %v450 = vld [vmem:[%s348 + $0xa] sm:$0x3f]
    %v451 = vld [vmem:[%s348 + $0x12] sm:$0xff]
    %v452 = vld [vmem:[%s348 + $0x1a] sm:$0x3f]
    %v453 = vld [vmem:[%s348 + $0x22] sm:$0xff]
    %v454 = vld [vmem:[%s348 + $0x2a] sm:$0x3f]
    %v455 = vld [vmem:[%s348 + $0x32] sm:$0xff]
    %v456 = vld [vmem:[%s348 + $0x3a] sm:$0x3f]
    %v457 = vld [vmem:[%s348 + $0x42] sm:$0xff]
    %v458 = vld [vmem:[%s348 + $0x4a] sm:$0x3f]
    %v459 = vld [vmem:[%s348 + $0x52] sm:$0xff]
    %v460 = vld [vmem:[%s348 + $0x5a] sm:$0x3f]
    %v461 = vld [vmem:[%s348 + $0x62] sm:$0xff]
    %v462 = vld [vmem:[%s348 + $0x6a] sm:$0x3f]
    %v463 = vld [vmem:[%s348 + $0x72] sm:$0xff]
    %v464 = vld [vmem:[%s348 + $0x7a] sm:$0x3f]
    %s465 = sld [smem:[#allocation3 + $0x8]]
    %v466 = vstv %s465
    %v467 = vmul.f32 %v466, %v449
    %v468 = vmul.f32 %v466, %v450
    %v469 = vmul.f32 %v466, %v451
    %v470 = vmul.f32 %v466, %v452
    %v471 = vmul.f32 %v466, %v453
    %v472 = vmul.f32 %v466, %v454
    %v473 = vmul.f32 %v466, %v455
    %v474 = vmul.f32 %v466, %v456
    %v475 = vmul.f32 %v466, %v457
    %v476 = vmul.f32 %v466, %v458
    %v477 = vmul.f32 %v466, %v459
    %v478 = vmul.f32 %v466, %v460
    %v479 = vmul.f32 %v466, %v461
    %v480 = vmul.f32 %v466, %v462
    %v481 = vmul.f32 %v466, %v463
    %v482 = vmul.f32 %v466, %v464
    %v483 = vadd.f32 %v433, %v467
    %v484 = vadd.f32 %v434, %v468
    %v485 = vadd.f32 %v435, %v469
    %v486 = vadd.f32 %v436, %v470
    %v487 = vadd.f32 %v437, %v471
    %v488 = vadd.f32 %v438, %v472
    %v489 = vadd.f32 %v439, %v473
    %v490 = vadd.f32 %v440, %v474
    %v491 = vadd.f32 %v441, %v475
    %v492 = vadd.f32 %v442, %v476
    %v493 = vadd.f32 %v443, %v477
    %v494 = vadd.f32 %v444, %v478
    %v495 = vadd.f32 %v445, %v479
    %v496 = vadd.f32 %v446, %v480
    %v497 = vadd.f32 %v447, %v481
    %v498 = vadd.f32 %v448, %v482
    %499 = vst [vmem:[#allocation8] sm:$0xff] %v483
    %500 = vst [vmem:[#allocation8 + $0x8] sm:$0x3f] %v484
    %501 = vst [vmem:[#allocation8 + $0x10] sm:$0xff] %v485
    %502 = vst [vmem:[#allocation8 + $0x18] sm:$0x3f] %v486
    %503 = vst [vmem:[#allocation8 + $0x20] sm:$0xff] %v487
    %504 = vst [vmem:[#allocation8 + $0x28] sm:$0x3f] %v488
    %505 = vst [vmem:[#allocation8 + $0x30] sm:$0xff] %v489
    %506 = vst [vmem:[#allocation8 + $0x38] sm:$0x3f] %v490
    %507 = vst [vmem:[#allocation8 + $0x40] sm:$0xff] %v491
    %508 = vst [vmem:[#allocation8 + $0x48] sm:$0x3f] %v492
    %509 = vst [vmem:[#allocation8 + $0x50] sm:$0xff] %v493
    %510 = vst [vmem:[#allocation8 + $0x58] sm:$0x3f] %v494
    %511 = vst [vmem:[#allocation8 + $0x60] sm:$0xff] %v495
    %512 = vst [vmem:[#allocation8 + $0x68] sm:$0x3f] %v496
    %513 = vst [vmem:[#allocation8 + $0x70] sm:$0xff] %v497
    %514 = vst [vmem:[#allocation8 + $0x78] sm:$0x3f] %v498
    %s515 = sadd.s32 0, 128
    %s516 = scalar_lea.vmem [#allocation7], %s515
    %v517 = vld [vmem:[%s516] sm:$0xff]
    %v518 = vld [vmem:[%s516 + $0x8] sm:$0x3f]
    %v519 = vld [vmem:[%s516 + $0x10] sm:$0xff]
    %v520 = vld [vmem:[%s516 + $0x18] sm:$0x3f]
    %v521 = vld [vmem:[%s516 + $0x20] sm:$0xff]
    %v522 = vld [vmem:[%s516 + $0x28] sm:$0x3f]
    %v523 = vld [vmem:[%s516 + $0x30] sm:$0xff]
    %v524 = vld [vmem:[%s516 + $0x38] sm:$0x3f]
    %v525 = vld [vmem:[%s516 + $0x40] sm:$0xff]
    %v526 = vld [vmem:[%s516 + $0x48] sm:$0x3f]
    %v527 = vld [vmem:[%s516 + $0x50] sm:$0xff]
    %v528 = vld [vmem:[%s516 + $0x58] sm:$0x3f]
    %s529 = sld [smem:[#allocation3]]
    %v530 = vstv %s529
    %v531 = vmul.f32 %v530, %v517
    %v532 = vmul.f32 %v530, %v518
    %v533 = vmul.f32 %v530, %v519
    %v534 = vmul.f32 %v530, %v520
    %v535 = vmul.f32 %v530, %v521
    %v536 = vmul.f32 %v530, %v522
    %v537 = vmul.f32 %v530, %v523
    %v538 = vmul.f32 %v530, %v524
    %v539 = vmul.f32 %v530, %v525
    %v540 = vmul.f32 %v530, %v526
    %v541 = vmul.f32 %v530, %v527
    %v542 = vmul.f32 %v530, %v528
    %v543 = vadd.f32 %v44, %v531
    %v544 = vadd.f32 %v44, %v532
    %v545 = vadd.f32 %v44, %v533
    %v546 = vadd.f32 %v44, %v534
    %v547 = vadd.f32 %v44, %v535
    %v548 = vadd.f32 %v44, %v536
    %v549 = vadd.f32 %v44, %v537
    %v550 = vadd.f32 %v44, %v538
    %v551 = vadd.f32 %v44, %v539
    %v552 = vadd.f32 %v44, %v540
    %v553 = vadd.f32 %v44, %v541
    %v554 = vadd.f32 %v44, %v542
    %v555 = vld [vmem:[%s516 + $0x1] sm:$0xff]
    %v556 = vld [vmem:[%s516 + $0x9] sm:$0x3f]
    %v557 = vld [vmem:[%s516 + $0x11] sm:$0xff]
    %v558 = vld [vmem:[%s516 + $0x19] sm:$0x3f]
    %v559 = vld [vmem:[%s516 + $0x21] sm:$0xff]
    %v560 = vld [vmem:[%s516 + $0x29] sm:$0x3f]
    %v561 = vld [vmem:[%s516 + $0x31] sm:$0xff]
    %v562 = vld [vmem:[%s516 + $0x39] sm:$0x3f]
    %v563 = vld [vmem:[%s516 + $0x41] sm:$0xff]
    %v564 = vld [vmem:[%s516 + $0x49] sm:$0x3f]
    %v565 = vld [vmem:[%s516 + $0x51] sm:$0xff]
    %v566 = vld [vmem:[%s516 + $0x59] sm:$0x3f]
    %s567 = sld [smem:[#allocation3 + $0x1]]
    %v568 = vstv %s567
    %v569 = vmul.f32 %v568, %v555
    %v570 = vmul.f32 %v568, %v556
    %v571 = vmul.f32 %v568, %v557
    %v572 = vmul.f32 %v568, %v558
    %v573 = vmul.f32 %v568, %v559
    %v574 = vmul.f32 %v568, %v560
    %v575 = vmul.f32 %v568, %v561
    %v576 = vmul.f32 %v568, %v562
    %v577 = vmul.f32 %v568, %v563
    %v578 = vmul.f32 %v568, %v564
    %v579 = vmul.f32 %v568, %v565
    %v580 = vmul.f32 %v568, %v566
    %v581 = vadd.f32 %v543, %v569
    %v582 = vadd.f32 %v544, %v570
    %v583 = vadd.f32 %v545, %v571
    %v584 = vadd.f32 %v546, %v572
    %v585 = vadd.f32 %v547, %v573
    %v586 = vadd.f32 %v548, %v574
    %v587 = vadd.f32 %v549, %v575
    %v588 = vadd.f32 %v550, %v576
    %v589 = vadd.f32 %v551, %v577
    %v590 = vadd.f32 %v552, %v578
    %v591 = vadd.f32 %v553, %v579
    %v592 = vadd.f32 %v554, %v580
    %v593 = vld [vmem:[%s516 + $0x2] sm:$0xff]
    %v594 = vld [vmem:[%s516 + $0xa] sm:$0x3f]
    %v595 = vld [vmem:[%s516 + $0x12] sm:$0xff]
    %v596 = vld [vmem:[%s516 + $0x1a] sm:$0x3f]
    %v597 = vld [vmem:[%s516 + $0x22] sm:$0xff]
    %v598 = vld [vmem:[%s516 + $0x2a] sm:$0x3f]
    %v599 = vld [vmem:[%s516 + $0x32] sm:$0xff]
    %v600 = vld [vmem:[%s516 + $0x3a] sm:$0x3f]
    %v601 = vld [vmem:[%s516 + $0x42] sm:$0xff]
    %v602 = vld [vmem:[%s516 + $0x4a] sm:$0x3f]
    %v603 = vld [vmem:[%s516 + $0x52] sm:$0xff]
    %v604 = vld [vmem:[%s516 + $0x5a] sm:$0x3f]
    %s605 = sld [smem:[#allocation3 + $0x2]]
    %v606 = vstv %s605
    %v607 = vmul.f32 %v606, %v593
    %v608 = vmul.f32 %v606, %v594
    %v609 = vmul.f32 %v606, %v595
    %v610 = vmul.f32 %v606, %v596
    %v611 = vmul.f32 %v606, %v597
    %v612 = vmul.f32 %v606, %v598
    %v613 = vmul.f32 %v606, %v599
    %v614 = vmul.f32 %v606, %v600
    %v615 = vmul.f32 %v606, %v601
    %v616 = vmul.f32 %v606, %v602
    %v617 = vmul.f32 %v606, %v603
    %v618 = vmul.f32 %v606, %v604
    %v619 = vadd.f32 %v581, %v607
    %v620 = vadd.f32 %v582, %v608
    %v621 = vadd.f32 %v583, %v609
    %v622 = vadd.f32 %v584, %v610
    %v623 = vadd.f32 %v585, %v611
    %v624 = vadd.f32 %v586, %v612
    %v625 = vadd.f32 %v587, %v613
    %v626 = vadd.f32 %v588, %v614
    %v627 = vadd.f32 %v589, %v615
    %v628 = vadd.f32 %v590, %v616
    %v629 = vadd.f32 %v591, %v617
    %v630 = vadd.f32 %v592, %v618
    %s631 = sadd.s32 0, 144
    %s632 = scalar_lea.vmem [#allocation7], %s631
    %v633 = vld [vmem:[%s632] sm:$0xff]
    %v634 = vld [vmem:[%s632 + $0x8] sm:$0x3f]
    %v635 = vld [vmem:[%s632 + $0x10] sm:$0xff]
    %v636 = vld [vmem:[%s632 + $0x18] sm:$0x3f]
    %v637 = vld [vmem:[%s632 + $0x20] sm:$0xff]
    %v638 = vld [vmem:[%s632 + $0x28] sm:$0x3f]
    %v639 = vld [vmem:[%s632 + $0x30] sm:$0xff]
    %v640 = vld [vmem:[%s632 + $0x38] sm:$0x3f]
    %v641 = vld [vmem:[%s632 + $0x40] sm:$0xff]
    %v642 = vld [vmem:[%s632 + $0x48] sm:$0x3f]
    %v643 = vld [vmem:[%s632 + $0x50] sm:$0xff]
    %v644 = vld [vmem:[%s632 + $0x58] sm:$0x3f]
    %s645 = sld [smem:[#allocation3 + $0x3]]
    %v646 = vstv %s645
    %v647 = vmul.f32 %v646, %v633
    %v648 = vmul.f32 %v646, %v634
    %v649 = vmul.f32 %v646, %v635
    %v650 = vmul.f32 %v646, %v636
    %v651 = vmul.f32 %v646, %v637
    %v652 = vmul.f32 %v646, %v638
    %v653 = vmul.f32 %v646, %v639
    %v654 = vmul.f32 %v646, %v640
    %v655 = vmul.f32 %v646, %v641
    %v656 = vmul.f32 %v646, %v642
    %v657 = vmul.f32 %v646, %v643
    %v658 = vmul.f32 %v646, %v644
    %v659 = vadd.f32 %v619, %v647
    %v660 = vadd.f32 %v620, %v648
    %v661 = vadd.f32 %v621, %v649
    %v662 = vadd.f32 %v622, %v650
    %v663 = vadd.f32 %v623, %v651
    %v664 = vadd.f32 %v624, %v652
    %v665 = vadd.f32 %v625, %v653
    %v666 = vadd.f32 %v626, %v654
    %v667 = vadd.f32 %v627, %v655
    %v668 = vadd.f32 %v628, %v656
    %v669 = vadd.f32 %v629, %v657
    %v670 = vadd.f32 %v630, %v658
    %v671 = vld [vmem:[%s632 + $0x1] sm:$0xff]
    %v672 = vld [vmem:[%s632 + $0x9] sm:$0x3f]
    %v673 = vld [vmem:[%s632 + $0x11] sm:$0xff]
    %v674 = vld [vmem:[%s632 + $0x19] sm:$0x3f]
    %v675 = vld [vmem:[%s632 + $0x21] sm:$0xff]
    %v676 = vld [vmem:[%s632 + $0x29] sm:$0x3f]
    %v677 = vld [vmem:[%s632 + $0x31] sm:$0xff]
    %v678 = vld [vmem:[%s632 + $0x39] sm:$0x3f]
    %v679 = vld [vmem:[%s632 + $0x41] sm:$0xff]
    %v680 = vld [vmem:[%s632 + $0x49] sm:$0x3f]
    %v681 = vld [vmem:[%s632 + $0x51] sm:$0xff]
    %v682 = vld [vmem:[%s632 + $0x59] sm:$0x3f]
    %s683 = sld [smem:[#allocation3 + $0x4]]
    %v684 = vstv %s683
    %v685 = vmul.f32 %v684, %v671
    %v686 = vmul.f32 %v684, %v672
    %v687 = vmul.f32 %v684, %v673
    %v688 = vmul.f32 %v684, %v674
    %v689 = vmul.f32 %v684, %v675
    %v690 = vmul.f32 %v684, %v676
    %v691 = vmul.f32 %v684, %v677
    %v692 = vmul.f32 %v684, %v678
    %v693 = vmul.f32 %v684, %v679
    %v694 = vmul.f32 %v684, %v680
    %v695 = vmul.f32 %v684, %v681
    %v696 = vmul.f32 %v684, %v682
    %v697 = vadd.f32 %v659, %v685
    %v698 = vadd.f32 %v660, %v686
    %v699 = vadd.f32 %v661, %v687
    %v700 = vadd.f32 %v662, %v688
    %v701 = vadd.f32 %v663, %v689
    %v702 = vadd.f32 %v664, %v690
    %v703 = vadd.f32 %v665, %v691
    %v704 = vadd.f32 %v666, %v692
    %v705 = vadd.f32 %v667, %v693
    %v706 = vadd.f32 %v668, %v694
    %v707 = vadd.f32 %v669, %v695
    %v708 = vadd.f32 %v670, %v696
    %v709 = vld [vmem:[%s632 + $0x2] sm:$0xff]
    %v710 = vld [vmem:[%s632 + $0xa] sm:$0x3f]
    %v711 = vld [vmem:[%s632 + $0x12] sm:$0xff]
    %v712 = vld [vmem:[%s632 + $0x1a] sm:$0x3f]
    %v713 = vld [vmem:[%s632 + $0x22] sm:$0xff]
    %v714 = vld [vmem:[%s632 + $0x2a] sm:$0x3f]
    %v715 = vld [vmem:[%s632 + $0x32] sm:$0xff]
    %v716 = vld [vmem:[%s632 + $0x3a] sm:$0x3f]
    %v717 = vld [vmem:[%s632 + $0x42] sm:$0xff]
    %v718 = vld [vmem:[%s632 + $0x4a] sm:$0x3f]
    %v719 = vld [vmem:[%s632 + $0x52] sm:$0xff]
    %v720 = vld [vmem:[%s632 + $0x5a] sm:$0x3f]
    %s721 = sld [smem:[#allocation3 + $0x5]]
    %v722 = vstv %s721
    %v723 = vmul.f32 %v722, %v709
    %v724 = vmul.f32 %v722, %v710
    %v725 = vmul.f32 %v722, %v711
    %v726 = vmul.f32 %v722, %v712
    %v727 = vmul.f32 %v722, %v713
    %v728 = vmul.f32 %v722, %v714
    %v729 = vmul.f32 %v722, %v715
    %v730 = vmul.f32 %v722, %v716
    %v731 = vmul.f32 %v722, %v717
    %v732 = vmul.f32 %v722, %v718
    %v733 = vmul.f32 %v722, %v719
    %v734 = vmul.f32 %v722, %v720
    %v735 = vadd.f32 %v697, %v723
    %v736 = vadd.f32 %v698, %v724
    %v737 = vadd.f32 %v699, %v725
    %v738 = vadd.f32 %v700, %v726
    %v739 = vadd.f32 %v701, %v727
    %v740 = vadd.f32 %v702, %v728
    %v741 = vadd.f32 %v703, %v729
    %v742 = vadd.f32 %v704, %v730
    %v743 = vadd.f32 %v705, %v731
    %v744 = vadd.f32 %v706, %v732
    %v745 = vadd.f32 %v707, %v733
    %v746 = vadd.f32 %v708, %v734
    %s747 = sadd.s32 0, 160
    %s748 = scalar_lea.vmem [#allocation7], %s747
    %v749 = vld [vmem:[%s748] sm:$0xff]
    %v750 = vld [vmem:[%s748 + $0x8] sm:$0x3f]
    %v751 = vld [vmem:[%s748 + $0x10] sm:$0xff]
    %v752 = vld [vmem:[%s748 + $0x18] sm:$0x3f]
    %v753 = vld [vmem:[%s748 + $0x20] sm:$0xff]
    %v754 = vld [vmem:[%s748 + $0x28] sm:$0x3f]
    %v755 = vld [vmem:[%s748 + $0x30] sm:$0xff]
    %v756 = vld [vmem:[%s748 + $0x38] sm:$0x3f]
    %v757 = vld [vmem:[%s748 + $0x40] sm:$0xff]
    %v758 = vld [vmem:[%s748 + $0x48] sm:$0x3f]
    %v759 = vld [vmem:[%s748 + $0x50] sm:$0xff]
    %v760 = vld [vmem:[%s748 + $0x58] sm:$0x3f]
    %s761 = sld [smem:[#allocation3 + $0x6]]
    %v762 = vstv %s761
    %v763 = vmul.f32 %v762, %v749
    %v764 = vmul.f32 %v762, %v750
    %v765 = vmul.f32 %v762, %v751
    %v766 = vmul.f32 %v762, %v752
    %v767 = vmul.f32 %v762, %v753
    %v768 = vmul.f32 %v762, %v754
    %v769 = vmul.f32 %v762, %v755
    %v770 = vmul.f32 %v762, %v756
    %v771 = vmul.f32 %v762, %v757
    %v772 = vmul.f32 %v762, %v758
    %v773 = vmul.f32 %v762, %v759
    %v774 = vmul.f32 %v762, %v760
    %v775 = vadd.f32 %v735, %v763
    %v776 = vadd.f32 %v736, %v764
    %v777 = vadd.f32 %v737, %v765
    %v778 = vadd.f32 %v738, %v766
    %v779 = vadd.f32 %v739, %v767
    %v780 = vadd.f32 %v740, %v768
    %v781 = vadd.f32 %v741, %v769
    %v782 = vadd.f32 %v742, %v770
    %v783 = vadd.f32 %v743, %v771
    %v784 = vadd.f32 %v744, %v772
    %v785 = vadd.f32 %v745, %v773
    %v786 = vadd.f32 %v746, %v774
    %v787 = vld [vmem:[%s748 + $0x1] sm:$0xff]
    %v788 = vld [vmem:[%s748 + $0x9] sm:$0x3f]
    %v789 = vld [vmem:[%s748 + $0x11] sm:$0xff]
    %v790 = vld [vmem:[%s748 + $0x19] sm:$0x3f]
    %v791 = vld [vmem:[%s748 + $0x21] sm:$0xff]
    %v792 = vld [vmem:[%s748 + $0x29] sm:$0x3f]
    %v793 = vld [vmem:[%s748 + $0x31] sm:$0xff]
    %v794 = vld [vmem:[%s748 + $0x39] sm:$0x3f]
    %v795 = vld [vmem:[%s748 + $0x41] sm:$0xff]
    %v796 = vld [vmem:[%s748 + $0x49] sm:$0x3f]
    %v797 = vld [vmem:[%s748 + $0x51] sm:$0xff]
    %v798 = vld [vmem:[%s748 + $0x59] sm:$0x3f]
    %s799 = sld [smem:[#allocation3 + $0x7]]
    %v800 = vstv %s799
    %v801 = vmul.f32 %v800, %v787
    %v802 = vmul.f32 %v800, %v788
    %v803 = vmul.f32 %v800, %v789
    %v804 = vmul.f32 %v800, %v790
    %v805 = vmul.f32 %v800, %v791
    %v806 = vmul.f32 %v800, %v792
    %v807 = vmul.f32 %v800, %v793
    %v808 = vmul.f32 %v800, %v794
    %v809 = vmul.f32 %v800, %v795
    %v810 = vmul.f32 %v800, %v796
    %v811 = vmul.f32 %v800, %v797
    %v812 = vmul.f32 %v800, %v798
    %v813 = vadd.f32 %v775, %v801
    %v814 = vadd.f32 %v776, %v802
    %v815 = vadd.f32 %v777, %v803
    %v816 = vadd.f32 %v778, %v804
    %v817 = vadd.f32 %v779, %v805
    %v818 = vadd.f32 %v780, %v806
    %v819 = vadd.f32 %v781, %v807
    %v820 = vadd.f32 %v782, %v808
    %v821 = vadd.f32 %v783, %v809
    %v822 = vadd.f32 %v784, %v810
    %v823 = vadd.f32 %v785, %v811
    %v824 = vadd.f32 %v786, %v812
    %v825 = vld [vmem:[%s748 + $0x2] sm:$0xff]
    %v826 = vld [vmem:[%s748 + $0xa] sm:$0x3f]
    %v827 = vld [vmem:[%s748 + $0x12] sm:$0xff]
    %v828 = vld [vmem:[%s748 + $0x1a] sm:$0x3f]
    %v829 = vld [vmem:[%s748 + $0x22] sm:$0xff]
    %v830 = vld [vmem:[%s748 + $0x2a] sm:$0x3f]
    %v831 = vld [vmem:[%s748 + $0x32] sm:$0xff]
    %v832 = vld [vmem:[%s748 + $0x3a] sm:$0x3f]
    %v833 = vld [vmem:[%s748 + $0x42] sm:$0xff]
    %v834 = vld [vmem:[%s748 + $0x4a] sm:$0x3f]
    %v835 = vld [vmem:[%s748 + $0x52] sm:$0xff]
    %v836 = vld [vmem:[%s748 + $0x5a] sm:$0x3f]
    %s837 = sld [smem:[#allocation3 + $0x8]]
    %v838 = vstv %s837
    %v839 = vmul.f32 %v838, %v825
    %v840 = vmul.f32 %v838, %v826
    %v841 = vmul.f32 %v838, %v827
    %v842 = vmul.f32 %v838, %v828
    %v843 = vmul.f32 %v838, %v829
    %v844 = vmul.f32 %v838, %v830
    %v845 = vmul.f32 %v838, %v831
    %v846 = vmul.f32 %v838, %v832
    %v847 = vmul.f32 %v838, %v833
    %v848 = vmul.f32 %v838, %v834
    %v849 = vmul.f32 %v838, %v835
    %v850 = vmul.f32 %v838, %v836
    %v851 = vadd.f32 %v813, %v839
    %v852 = vadd.f32 %v814, %v840
    %v853 = vadd.f32 %v815, %v841
    %v854 = vadd.f32 %v816, %v842
    %v855 = vadd.f32 %v817, %v843
    %v856 = vadd.f32 %v818, %v844
    %v857 = vadd.f32 %v819, %v845
    %v858 = vadd.f32 %v820, %v846
    %v859 = vadd.f32 %v821, %v847
    %v860 = vadd.f32 %v822, %v848
    %v861 = vadd.f32 %v823, %v849
    %v862 = vadd.f32 %v824, %v850
    %s863 = scalar_lea.vmem [#allocation8], %s515
    %864 = vst [vmem:[%s863] sm:$0xff] %v851
    %865 = vst [vmem:[%s863 + $0x8] sm:$0x3f] %v852
    %866 = vst [vmem:[%s863 + $0x10] sm:$0xff] %v853
    %867 = vst [vmem:[%s863 + $0x18] sm:$0x3f] %v854
    %868 = vst [vmem:[%s863 + $0x20] sm:$0xff] %v855
    %869 = vst [vmem:[%s863 + $0x28] sm:$0x3f] %v856
    %870 = vst [vmem:[%s863 + $0x30] sm:$0xff] %v857
    %871 = vst [vmem:[%s863 + $0x38] sm:$0x3f] %v858
    %872 = vst [vmem:[%s863 + $0x40] sm:$0xff] %v859
    %873 = vst [vmem:[%s863 + $0x48] sm:$0x3f] %v860
    %874 = vst [vmem:[%s863 + $0x50] sm:$0xff] %v861
    %875 = vst [vmem:[%s863 + $0x58] sm:$0x3f] %v862
    // Predicated region
    $region22: #{tpu_custom_call.1} parent=1 // pred_check
      _
    $region23: #{tpu_custom_call.1} parent=1 // pred_check_branch
      %877 = sbr.rel (0) target = $region25
    $region24: #{tpu_custom_call.1} parent=1 // pred_region
      %s879 = ssub.s32 3584, 3584
      %880 = vsyncadd [#allocation5], %s879
      %s881 = sshll.u32 [#allocation8], 4
      %s882 = int_to_ptr.vmem [resolvable:$true] %s881
      %887 = dma.vmem_to_hbm [thread:$0]  %s882, 3584, %s3, [#allocation5], 128, 128, 8
    $region25: #{tpu_custom_call.1} parent=1 // pred_fallthru
      _
    // Predicated region
    $region26: #{tpu_custom_call.1} parent=1 // pred_check
      _
    $region27: #{tpu_custom_call.1} parent=1 // pred_check_branch
      %889 = sbr.rel (0) target = $region29
    $region28: #{tpu_custom_call.1} parent=1 // pred_region
      %890 = dma.done [#allocation5], 3584
    $region29: #{tpu_custom_call.1} parent=1 // pred_fallthru
      _
    %891 = vsyncpa [#allocation4], 1
    %892 = vsyncpa [#allocation5], 1
    %893 = vsyncpa [#allocation6], 1

</llo_original>
